<compile_context>
chip_gen: v7x
topology: tpu7x:2x2x1
jax: 0.10.0
libtpu: 0.0.40
codegen_flags: <defaults>
</compile_context>

<pallas_src>
import jax
import jax.numpy as jnp
from jax.experimental import pallas as pl
from jax.experimental.pallas import tpu as pltpu


def _round_up(n, m):
    return ((n + m - 1) // m) * m


def critic_kernel(x_ref, w1_ref, b1_ref, w2_ref, b2_ref, out_ref):
    # Layer 1: MXU matmul (f32 accumulate) + f32 bias + EUP tanh.
    h = jnp.tanh(
        jnp.dot(x_ref[...], w1_ref[...], preferred_element_type=jnp.float32)
        + b1_ref[...]
    )
    # Value head: lane-padded W2 keeps the dot MXU-friendly; only the real
    # output columns are stored (narrow masked store; negligible HBM bytes).
    vals = (
        jnp.dot(h.astype(w2_ref.dtype), w2_ref[...],
                preferred_element_type=jnp.float32)
        + b2_ref[...]
    )
    out_ref[...] = vals[:, : out_ref.shape[1]].astype(out_ref.dtype)


def critic_forward(x, w1, b1, w2, b2, *, out_dim, block_b=2048,
                   compute_dtype=None, fallback_below=32):
    """Critic forward.

    x:  (B, In) f32
    w1: (In, Hp)  b1: (1, Hp)   -- Hp = hidden_dim zero-padded to 128 lanes
    w2: (Hp, Op)  b2: (1, Op)   -- Op = output_dim zero-padded to 128 lanes
    Returns (B, out_dim) f32.
    """
    B, In = x.shape
    Hp = w1.shape[1]
    Op = w2.shape[1]

    # Tiny batches: fused XLA is as fast or faster than pallas_call overhead.
    if B < fallback_below:
        h = jnp.tanh(x @ w1 + b1)
        return (h @ w2 + b2)[:, :out_dim]

    if compute_dtype is not None:
        # bf16-at-the-boundary (v6e/v7x lever): halves x/W DMA bytes; both dots
        # still accumulate in f32 via preferred_element_type.
        x = x.astype(compute_dtype)
        w1 = w1.astype(compute_dtype)
        w2 = w2.astype(compute_dtype)

    TB = min(block_b, _round_up(B, 8))
    grid = (pl.cdiv(B, TB),)

    nbytes = lambda a: a.size * a.dtype.itemsize
    cost = pl.CostEstimate(
        flops=2 * B * (In * Hp + Hp * Op),
        transcendentals=B * Hp,
        bytes_accessed=(nbytes(x) + nbytes(w1) + nbytes(b1)
                        + nbytes(w2) + nbytes(b2) + B * out_dim * 4),
    )

    return pl.pallas_call(
        critic_kernel,
        out_shape=jax.ShapeDtypeStruct((B, out_dim), jnp.float32),
        grid=grid,
        in_specs=[
            pl.BlockSpec((TB, In), lambda i: (i, 0)),   # x: tiled along batch
            pl.BlockSpec((In, Hp), lambda i: (0, 0)),   # W1: VMEM-resident
            pl.BlockSpec((1, Hp), lambda i: (0, 0)),    # b1
            pl.BlockSpec((Hp, Op), lambda i: (0, 0)),   # W2
            pl.BlockSpec((1, Op), lambda i: (0, 0)),    # b2
        ],
        out_specs=pl.BlockSpec((TB, out_dim), lambda i: (i, 0)),
        compiler_params=pltpu.CompilerParams(
            # Batch axis is embarrassingly parallel (megacore / v7x 2-TC).
            # TODO(synk): if v7x profiling shows only one TC busy, switch to
            # pltpu.CORE_PARALLEL or an explicit pl.core_map over a 2-core mesh.
            dimension_semantics=("parallel",)
        ),
        cost_estimate=cost,
    )(x, w1, b1, w2, b2)


def init_critic_params(key, input_dim, hidden_dim, output_dim, *, lane=128):
    """Deterministic init mirroring nn.Linear defaults + the in-__init__ scaling.

    Weights are stored pre-transposed as (in_features, out_features); hidden and
    output feature axes are zero-padded to a multiple of 128 lanes.  Zero
    padding is math-preserving: padded hidden units see zero weights & bias
    (tanh(0)=0 -> zero contribution) and padded output columns are never stored.
    Returns (padded params for the kernel, unpadded params for reference).
    """
    k1, k2, k3, k4 = jax.random.split(key, 4)

    bound1 = 1.0 / jnp.sqrt(input_dim)
    w1 = jax.random.uniform(k1, (input_dim, hidden_dim), jnp.float32, -bound1, bound1)
    b1 = jax.random.uniform(k2, (hidden_dim,), jnp.float32, -bound1, bound1)

    bound2 = 1.0 / jnp.sqrt(hidden_dim)
    w2 = jax.random.uniform(k3, (hidden_dim, output_dim), jnp.float32, -bound2, bound2)
    b2 = jax.random.uniform(k4, (output_dim,), jnp.float32, -bound2, bound2)
    w2 = w2 * 0.1   # value_head.weight.data.mul_(0.1)
    b2 = b2 * 0.0   # value_head.bias.data.mul_(0.0)

    Hp = _round_up(hidden_dim, lane)
    Op = _round_up(output_dim, lane)
    w1_p = jnp.zeros((input_dim, Hp), jnp.float32).at[:, :hidden_dim].set(w1)
    b1_p = jnp.zeros((1, Hp), jnp.float32).at[:, :hidden_dim].set(b1)
    w2_p = jnp.zeros((Hp, Op), jnp.float32).at[:hidden_dim, :output_dim].set(w2)
    b2_p = jnp.zeros((1, Op), jnp.float32).at[:, :output_dim].set(b2)

    return (w1_p, b1_p, w2_p, b2_p), (w1, b1, w2, b2)


if __name__ == "__main__":
    batch, input_dim, hidden_dim, output_dim = 201, 16, 32, 1

    key = jax.random.PRNGKey(0)
    kx, kp = jax.random.split(key)
    x = jax.random.normal(kx, (batch, input_dim), jnp.float32)
    (w1_p, b1_p, w2_p, b2_p), (w1, b1, w2, b2) = init_critic_params(
        kp, input_dim, hidden_dim, output_dim
    )

    # Small block_b so the demo exercises multiple grid steps plus the ragged
    # (masked) edge block; production default is block_b=2048.
    values = critic_forward(x, w1_p, b1_p, w2_p, b2_p,
                            out_dim=output_dim, block_b=64)
    jax.block_until_ready(values)

    # Pure-JAX reference (unpadded params).
    h_ref = jnp.tanh(x @ w1 + b1[None, :])
    values_ref = h_ref @ w2 + b2[None, :]
    assert values.shape == (batch, output_dim)
    assert jnp.allclose(values, values_ref, atol=1e-5), (
        float(jnp.max(jnp.abs(values - values_ref)))
    )

    # Tiny-batch path (pure-JAX fallback) sanity check.
    v_small = critic_forward(x[:8], w1_p, b1_p, w2_p, b2_p, out_dim=output_dim)
    assert jnp.allclose(v_small, values_ref[:8], atol=1e-5)

    print("KERNEL_OK")
</pallas_src>

<mosaic_0001>
module attributes {stable_mosaic.version = 11 : i64} {
  func.func @critic_kernel(%arg0: i32, %arg1: memref<64x16xf32, #tpu.memory_space<vmem>>, %arg2: memref<16x128xf32, #tpu.memory_space<vmem>>, %arg3: memref<1x128xf32, #tpu.memory_space<vmem>>, %arg4: memref<128x128xf32, #tpu.memory_space<vmem>>, %arg5: memref<1x128xf32, #tpu.memory_space<vmem>>, %arg6: memref<64x1xf32, #tpu.memory_space<vmem>>) attributes {dimension_semantics = [#tpu.dimension_semantics<parallel>], iteration_bounds = array<i64: 4>, scalar_prefetch = 0 : i64, scratch_operands = 0 : i64, tpu.core_type = #tpu.core_type<tc>, window_params = [{transform_indices = @transform_0, window_bounds = array<i64: 64, 16>}, {pipeline_mode = #tpu.pipeline_mode<synchronous>, transform_indices = @transform_1, window_bounds = array<i64: 16, 128>}, {pipeline_mode = #tpu.pipeline_mode<synchronous>, transform_indices = @transform_2, window_bounds = array<i64: 1, 128>}, {pipeline_mode = #tpu.pipeline_mode<synchronous>, transform_indices = @transform_3, window_bounds = array<i64: 128, 128>}, {pipeline_mode = #tpu.pipeline_mode<synchronous>, transform_indices = @transform_4, window_bounds = array<i64: 1, 128>}, {transform_indices = @transform_5, window_bounds = array<i64: 64, 1>}]} {
    %c0 = arith.constant 0 : index
    %c0_0 = arith.constant 0 : index
    %0 = vector.load %arg1[%c0, %c0_0] : memref<64x16xf32, #tpu.memory_space<vmem>>, vector<64x16xf32>
    %c0_1 = arith.constant 0 : index
    %c0_2 = arith.constant 0 : index
    %1 = vector.load %arg2[%c0_1, %c0_2] : memref<16x128xf32, #tpu.memory_space<vmem>>, vector<16x128xf32>
    %cst = arith.constant dense<0.000000e+00> : vector<64x128xf32>
    %2 = tpu.matmul %0, %1, %cst {dimension_numbers = #tpu.dot_dimension_numbers<[1], [0], [0], [1], [0, 0, 1, 1], [], []>} : vector<64x16xf32>, vector<16x128xf32>, vector<64x128xf32> -> vector<64x128xf32>
    %c0_3 = arith.constant 0 : index
    %c0_4 = arith.constant 0 : index
    %3 = vector.load %arg3[%c0_3, %c0_4] : memref<1x128xf32, #tpu.memory_space<vmem>>, vector<1x128xf32>
    %4 = vector.broadcast %3 : vector<1x128xf32> to vector<64x128xf32>
    %5 = arith.addf %2, %4 : vector<64x128xf32>
    %6 = math.tanh %5 : vector<64x128xf32>
    %c0_5 = arith.constant 0 : index
    %c0_6 = arith.constant 0 : index
    %7 = vector.load %arg4[%c0_5, %c0_6] : memref<128x128xf32, #tpu.memory_space<vmem>>, vector<128x128xf32>
    %cst_7 = arith.constant dense<0.000000e+00> : vector<64x128xf32>
    %8 = tpu.matmul %6, %7, %cst_7 {dimension_numbers = #tpu.dot_dimension_numbers<[1], [0], [0], [1], [0, 0, 1, 1], [], []>} : vector<64x128xf32>, vector<128x128xf32>, vector<64x128xf32> -> vector<64x128xf32>
    %c0_8 = arith.constant 0 : index
    %c0_9 = arith.constant 0 : index
    %9 = vector.load %arg5[%c0_8, %c0_9] : memref<1x128xf32, #tpu.memory_space<vmem>>, vector<1x128xf32>
    %10 = vector.broadcast %9 : vector<1x128xf32> to vector<64x128xf32>
    %11 = arith.addf %8, %10 : vector<64x128xf32>
    %12 = vector.extract_strided_slice %11 {offsets = [0, 0], sizes = [64, 1], strides = [1, 1]} : vector<64x128xf32> to vector<64x1xf32>
    %c0_10 = arith.constant 0 : index
    %c0_11 = arith.constant 0 : index
    %13 = vector.load %arg6[%c0_10, %c0_11] : memref<64x1xf32, #tpu.memory_space<vmem>>, vector<64x1xf32>
    tpu.vector_store %arg6[%c0_10, %c0_11], %12 {strides = array<i32>} : memref<64x1xf32, #tpu.memory_space<vmem>>, vector<64x1xf32>,
    return
  }
  func.func @transform_0(%arg0: i32) -> (i32, i32) {
    %c0_i32 = arith.constant 0 : i32
    %c0_i32_0 = arith.constant 0 : i32
    return %arg0, %c0_i32 : i32, i32
  }
  func.func @transform_1(%arg0: i32) -> (i32, i32) {
    %c0_i32 = arith.constant 0 : i32
    %c0_i32_0 = arith.constant 0 : i32
    %c0_i32_1 = arith.constant 0 : i32
    return %c0_i32, %c0_i32_0 : i32, i32
  }
  func.func @transform_2(%arg0: i32) -> (i32, i32) {
    %c0_i32 = arith.constant 0 : i32
    %c0_i32_0 = arith.constant 0 : i32
    %c0_i32_1 = arith.constant 0 : i32
    return %c0_i32, %c0_i32_0 : i32, i32
  }
  func.func @transform_3(%arg0: i32) -> (i32, i32) {
    %c0_i32 = arith.constant 0 : i32
    %c0_i32_0 = arith.constant 0 : i32
    %c0_i32_1 = arith.constant 0 : i32
    return %c0_i32, %c0_i32_0 : i32, i32
  }
  func.func @transform_4(%arg0: i32) -> (i32, i32) {
    %c0_i32 = arith.constant 0 : i32
    %c0_i32_0 = arith.constant 0 : i32
    %c0_i32_1 = arith.constant 0 : i32
    return %c0_i32, %c0_i32_0 : i32, i32
  }
  func.func @transform_5(%arg0: i32) -> (i32, i32) {
    %c0_i32 = arith.constant 0 : i32
    %c0_i32_0 = arith.constant 0 : i32
    return %arg0, %c0_i32 : i32, i32
  }
}

</mosaic_0001>

<llo_original>
// kernel: tpu_custom_call.1
$region0: #{tpu_custom_call.1}
  #allocation0 [shape = 'u32[]', space=smem, size = 0x4, offset = 0x4, fixed_abs, tag = 'smem constant byte address 0x4 - core index']
  #allocation1 [shape = 'u32[144,128]{1,0:T(1,128)}', space=vmem, size = 0x12000, scoped, tag = 'internal scratch']
  %s0 = inlined_call_operand.vmem [shape: f32[201,16], index: 0, kind: input, shape index: {}]
  %s1 = inlined_call_operand.vmem [shape: f32[16,128], index: 1, kind: input, shape index: {}]
  %s2 = inlined_call_operand.vmem [shape: f32[1,128], index: 2, kind: input, shape index: {}]
  %s3 = inlined_call_operand.vmem [shape: f32[128,128], index: 3, kind: input, shape index: {}]
  %s4 = inlined_call_operand.vmem [shape: f32[1,128], index: 4, kind: input, shape index: {}]
  %s5 = inlined_call_operand.vmem [shape: f32[201,1], index: 5, kind: output, shape index: {}]
  %s6 = sld [smem:[#allocation0]]
  $region101: #{tpu_custom_call.1} parent=0
    _
  %s8 = ssub.s32 1, %s6
  %s9 = scalar_select 0, %s8, %s6
  $region1: #{tpu_custom_call.1} parent=0
    #allocation2 [shape = 'u8[65536]{0}', space=vmem, size = 0x10000, scoped, tag = 'output window, operand 0']
    loop: start=0, step=1, limit=6
    $region2: #{tpu_custom_call.1} parent=1 // loop_pre_header
      _
    $region3: #{tpu_custom_call.1} parent=1 // loop_header
      %s11 = sphi 0, %s15
      %p12 = scmp.ge.s32.totalorder %s11, 6
      %s21 = sphi 0, %s23
      %s24 = sphi 0, %s21
      %s25 = sphi 0, %s24
      %s41 = sphi 0, %s25
      %s45 = sphi 0, %s45
      %s47 = sphi 0, %s45
      %s48 = sphi 0, %s47
      %s62 = sphi 0, %s48
      %s66 = sphi 0, %s66
      %s68 = sphi 0, %s66
      %s69 = sphi 0, %s68
      %s83 = sphi 0, %s69
      %s87 = sphi 0, %s87
      %s89 = sphi 0, %s87
      %s90 = sphi 0, %s89
      %s104 = sphi 0, %s90
      %s108 = sphi 0, %s108
      %s110 = sphi 0, %s108
      %s111 = sphi 0, %s110
      %s125 = sphi 0, %s111
      %s131 = sphi 0, %s133
      %s134 = sphi 0, %s131
      %s135 = sphi 0, %s134
      %s151 = sphi 0, %s135
    $region4: #{tpu_custom_call.1} parent=1 // loop_header_branch
      %14 = sbr.rel (%p12) target = $region8
    $region5: #{tpu_custom_call.1} parent=1 // loop_body
      %s16 = ssub.s32 %s11, 1
      %s17 = ssub.s32 %s11, 2
      %s18 = sadd.s32 %s11, 1
      %s19 = ssub.s32 %s11, %s18
      %p20 = scmp.eq.s32.totalorder %s19, 0
      %s22 = sadd.s32 %s21, 1
      %s23 = scalar_select %p20, %s21, %s22
      %p26 = pneg %p20
      %p27 = scmp.eq.s32.totalorder %s11, 3
      %p28 = por %p26, %p27
      %p29 = scmp.ne.s32.totalorder %s21, %s24
      %p30 = scmp.eq.s32.totalorder %s11, 0
      %p31 = por %p29, %p30
      %p32 = scmp.ne.s32.totalorder %s21, %s24
      %p33 = scmp.eq.s32.totalorder %s16, 3
      %p34 = por %p32, %p33
      %p35 = scmp.ne.s32.totalorder %s24, %s25
      %p36 = scmp.eq.s32.totalorder %s16, 0
      %p37 = por %p35, %p36
      %p38 = scmp.ne.s32.totalorder %s24, %s25
      %p39 = scmp.eq.s32.totalorder %s17, 3
      %p40 = por %p38, %p39
      %p42 = scmp.ne.s32.totalorder %s25, %s41
      %p43 = scmp.eq.s32.totalorder %s17, 0
      %p44 = por %p42, %p43
      %s46 = sadd.s32 %s45, 1
      %p49 = scmp.eq.s32.totalorder %s11, 3
      %p50 = scmp.ne.s32.totalorder %s45, %s47
      %p51 = scmp.eq.s32.totalorder %s11, 0
      %p52 = por %p50, %p51
      %p53 = scmp.ne.s32.totalorder %s45, %s47
      %p54 = scmp.eq.s32.totalorder %s16, 3
      %p55 = por %p53, %p54
      %p56 = scmp.ne.s32.totalorder %s47, %s48
      %p57 = scmp.eq.s32.totalorder %s16, 0
      %p58 = por %p56, %p57
      %p59 = scmp.ne.s32.totalorder %s47, %s48
      %p60 = scmp.eq.s32.totalorder %s17, 3
      %p61 = por %p59, %p60
      %p63 = scmp.ne.s32.totalorder %s48, %s62
      %p64 = scmp.eq.s32.totalorder %s17, 0
      %p65 = por %p63, %p64
      %s67 = sadd.s32 %s66, 1
      %p70 = scmp.eq.s32.totalorder %s11, 3
      %p71 = scmp.ne.s32.totalorder %s66, %s68
      %p72 = scmp.eq.s32.totalorder %s11, 0
      %p73 = por %p71, %p72
      %p74 = scmp.ne.s32.totalorder %s66, %s68
      %p75 = scmp.eq.s32.totalorder %s16, 3
      %p76 = por %p74, %p75
      %p77 = scmp.ne.s32.totalorder %s68, %s69
      %p78 = scmp.eq.s32.totalorder %s16, 0
      %p79 = por %p77, %p78
      %p80 = scmp.ne.s32.totalorder %s68, %s69
      %p81 = scmp.eq.s32.totalorder %s17, 3
      %p82 = por %p80, %p81
      %p84 = scmp.ne.s32.totalorder %s69, %s83
      %p85 = scmp.eq.s32.totalorder %s17, 0
      %p86 = por %p84, %p85
      %s88 = sadd.s32 %s87, 1
      %p91 = scmp.eq.s32.totalorder %s11, 3
      %p92 = scmp.ne.s32.totalorder %s87, %s89
      %p93 = scmp.eq.s32.totalorder %s11, 0
      %p94 = por %p92, %p93
      %p95 = scmp.ne.s32.totalorder %s87, %s89
      %p96 = scmp.eq.s32.totalorder %s16, 3
      %p97 = por %p95, %p96
      %p98 = scmp.ne.s32.totalorder %s89, %s90
      %p99 = scmp.eq.s32.totalorder %s16, 0
      %p100 = por %p98, %p99
      %p101 = scmp.ne.s32.totalorder %s89, %s90
      %p102 = scmp.eq.s32.totalorder %s17, 3
      %p103 = por %p101, %p102
      %p105 = scmp.ne.s32.totalorder %s90, %s104
      %p106 = scmp.eq.s32.totalorder %s17, 0
      %p107 = por %p105, %p106
      %s109 = sadd.s32 %s108, 1
      %p112 = scmp.eq.s32.totalorder %s11, 3
      %p113 = scmp.ne.s32.totalorder %s108, %s110
      %p114 = scmp.eq.s32.totalorder %s11, 0
      %p115 = por %p113, %p114
      %p116 = scmp.ne.s32.totalorder %s108, %s110
      %p117 = scmp.eq.s32.totalorder %s16, 3
      %p118 = por %p116, %p117
      %p119 = scmp.ne.s32.totalorder %s110, %s111
      %p120 = scmp.eq.s32.totalorder %s16, 0
      %p121 = por %p119, %p120
      %p122 = scmp.ne.s32.totalorder %s110, %s111
      %p123 = scmp.eq.s32.totalorder %s17, 3
      %p124 = por %p122, %p123
      %p126 = scmp.ne.s32.totalorder %s111, %s125
      %p127 = scmp.eq.s32.totalorder %s17, 0
      %p128 = por %p126, %p127
      %s129 = ssub.s32 %s11, %s18
      %p130 = scmp.eq.s32.totalorder %s129, 0
      %s132 = sadd.s32 %s131, 1
      %s133 = scalar_select %p130, %s131, %s132
      %p136 = pneg %p130
      %p137 = scmp.eq.s32.totalorder %s11, 3
      %p138 = por %p136, %p137
      %p139 = scmp.ne.s32.totalorder %s131, %s134
      %p140 = scmp.eq.s32.totalorder %s11, 0
      %p141 = por %p139, %p140
      %p142 = scmp.ne.s32.totalorder %s131, %s134
      %p143 = scmp.eq.s32.totalorder %s16, 3
      %p144 = por %p142, %p143
      %p145 = scmp.ne.s32.totalorder %s134, %s135
      %p146 = scmp.eq.s32.totalorder %s16, 0
      %p147 = por %p145, %p146
      %p148 = scmp.ne.s32.totalorder %s134, %s135
      %p149 = scmp.eq.s32.totalorder %s17, 3
      %p150 = por %p148, %p149
      %p152 = scmp.ne.s32.totalorder %s135, %s151
      %p153 = scmp.eq.s32.totalorder %s17, 0
      %p154 = por %p152, %p153
      %p155 = scmp.le.s32.totalorder 1, %s11
      %p156 = scmp.lt.s32.totalorder %s11, 5
      %p157 = pnand %p155, %p156
      %p158 = pneg %p157
      // Predicated region
      $region9: #{tpu_custom_call.1} parent=5 // pred_check
        _
      $region10: #{tpu_custom_call.1} parent=5 // pred_check_branch
        %160 = sbr.rel (%p157) target = $region12
      $region11: #{tpu_custom_call.1} parent=5 // pred_region
        %s161 = ssub.s32 %s11, 1
        // Predicated region
        $region13: #{tpu_custom_call.1} parent=11 // pred_check
          %p162 = pneg %p58
        $region14: #{tpu_custom_call.1} parent=11 // pred_check_branch
          %164 = sbr.rel (%p162) target = $region16
        $region15: #{tpu_custom_call.1} parent=11 // pred_region
          _
        $region16: #{tpu_custom_call.1} parent=11 // pred_fallthru
          _
        // Predicated region
        $region17: #{tpu_custom_call.1} parent=11 // pred_check
          %p165 = pneg %p79
        $region18: #{tpu_custom_call.1} parent=11 // pred_check_branch
          %167 = sbr.rel (%p165) target = $region20
        $region19: #{tpu_custom_call.1} parent=11 // pred_region
          _
        $region20: #{tpu_custom_call.1} parent=11 // pred_fallthru
          _
        // Predicated region
        $region21: #{tpu_custom_call.1} parent=11 // pred_check
          %p168 = pneg %p100
        $region22: #{tpu_custom_call.1} parent=11 // pred_check_branch
          %170 = sbr.rel (%p168) target = $region24
        $region23: #{tpu_custom_call.1} parent=11 // pred_region
          _
        $region24: #{tpu_custom_call.1} parent=11 // pred_fallthru
          _
        // Predicated region
        $region25: #{tpu_custom_call.1} parent=11 // pred_check
          %p171 = pneg %p121
        $region26: #{tpu_custom_call.1} parent=11 // pred_check_branch
          %173 = sbr.rel (%p171) target = $region28
        $region27: #{tpu_custom_call.1} parent=11 // pred_region
          _
        $region28: #{tpu_custom_call.1} parent=11 // pred_fallthru
          _
      $region12: #{tpu_custom_call.1} parent=5 // pred_fallthru
        _
      %p174 = scmp.lt.s32.totalorder %s11, 4
      // Predicated region
      $region29: #{tpu_custom_call.1} parent=5 // pred_check
        %p175 = pneg %p174
      $region30: #{tpu_custom_call.1} parent=5 // pred_check_branch
        %177 = sbr.rel (%p175) target = $region32
      $region31: #{tpu_custom_call.1} parent=5 // pred_region
        // Predicated region
        $region33: #{tpu_custom_call.1} parent=31 // pred_check
          %p178 = pneg %p31
        $region34: #{tpu_custom_call.1} parent=31 // pred_check_branch
          %180 = sbr.rel (%p178) target = $region36
        $region35: #{tpu_custom_call.1} parent=31 // pred_region
          %s181 = smul.u32 8, %s11
          %s182 = ssub.s32 26, %s181
          %p183 = scmp.lt.s32.totalorder %s182, 8
          %s184 = scalar_select %p183, %s182, 8
          %s185 = smul.u32 128, %s184
          %p186 = scmp.lt.s32.totalorder %s181, 25
          %s187 = scalar_select %p186, %s181, 25
          %s188 = smul.addr %s187, 8
          %s189 = scalar_lea.vmem %s0, %s188
          %s190 = smul.u32 8, %s11
          %s191 = ssub.s32 26, %s190
          %p192 = scmp.lt.s32.totalorder %s191, 8
          %s193 = scalar_select %p192, %s191, 8
          %s194 = smul.u32 128, %s193
        $region36: #{tpu_custom_call.1} parent=31 // pred_fallthru
          _
      $region32: #{tpu_custom_call.1} parent=5 // pred_fallthru
        _
      %p195 = scmp.le.s32.totalorder 1, %s11
      %p196 = scmp.lt.s32.totalorder %s11, 5
      %p197 = pnand %p195, %p196
      %p198 = pneg %p197
      // Predicated region
      $region37: #{tpu_custom_call.1} parent=5 // pred_check
        _
      $region38: #{tpu_custom_call.1} parent=5 // pred_check_branch
        %200 = sbr.rel (%p197) target = $region40
      $region39: #{tpu_custom_call.1} parent=5 // pred_region
        %s201 = ssub.s32 %s11, 1
        %s202 = smul.u32 8, %s16
        %s203 = ssub.s32 26, %s202
        %p204 = scmp.lt.s32.totalorder %s203, 8
        %s205 = scalar_select %p204, %s203, 8
        %s206 = smul.u32 128, %s205
        %p207 = scmp.lt.s32.totalorder %s202, 25
        %s208 = scalar_select %p207, %s202, 25
        %s209 = smul.addr %s208, 8
        %s210 = scalar_lea.vmem %s0, %s209
        %p211 = pneg %p37
        %p212 = pneg %p34
        %p213 = pneg %p58
        %p214 = pneg %p55
        %p215 = pneg %p79
        %p216 = pneg %p76
        %p217 = pneg %p100
        %p218 = pneg %p97
        %p219 = pneg %p121
        %p220 = pneg %p118
        %p221 = pneg %p147
        %p222 = pneg %p144
        %s223 = sand.u32 %s134, 1
        %s224 = sand.u32 %s134, 1
        %s225 = smul.addr %s224, 64
        %s226 = scalar_lea.vmem [#allocation2], %s225
        %s227 = smul.u32 8, %s16
        %s228 = ssub.s32 26, %s227
        %p229 = scmp.lt.s32.totalorder %s228, 8
        %s230 = scalar_select %p229, %s228, 8
        %s231 = smul.u32 128, %s230
        %p232 = scmp.lt.s32.totalorder %s227, 25
        %s233 = scalar_select %p232, %s227, 25
        %s234 = smul.addr %s233, 8
        %s235 = scalar_lea.vmem %s0, %s234
        %s236 = smul.u32 8, %s16
        %s237 = ssub.s32 26, %s236
        %p238 = scmp.lt.s32.totalorder %s237, 8
        %s239 = scalar_select %p238, %s237, 8
        %s240 = smul.u32 128, %s239
        %s241 = smul.u32 8, %s16
        %s242 = ssub.s32 26, %s241
        %p243 = scmp.lt.s32.totalorder %s242, 8
        %s244 = scalar_select %p243, %s242, 8
        %s245 = smul.u32 128, %s244
        %v246 = vld [vmem:[%s235] sm:$0xff]
        %v247 = vld [vmem:[%s235 + $0x8] sm:$0xff]
        %v248 = vld [vmem:[%s235 + $0x10] sm:$0xff]
        %v249 = vld [vmem:[%s235 + $0x18] sm:$0xff]
        %v250 = vld [vmem:[%s235 + $0x20] sm:$0xff]
        %v251 = vld [vmem:[%s235 + $0x28] sm:$0xff]
        %v252 = vld [vmem:[%s235 + $0x30] sm:$0xff]
        %v253 = vld [vmem:[%s235 + $0x38] sm:$0xff]
        %v254 = vld [vmem:[%s1] sm:$0xff]
        %v255 = vld [vmem:[%s1 + $0x8] sm:$0xff]
        %v256 = vld [vmem:[%s2] sm:$0x1]
        %v258 = vlaneseq
        %v259 = vshrl.u32 %v258, 7
        %v260 = vsub.s32 0, %v259
        %v261 = vrot.slane %v256, %v260
        %vm263 = vcmask 130048
        %v265 = vsel %vm263, %v246, 0
        %v268 = vsel %vm263, %v247, 0
        %v271 = vsel %vm263, %v248, 0
        %v274 = vsel %vm263, %v249, 0
        %v277 = vsel %vm263, %v250, 0
        %v280 = vsel %vm263, %v251, 0
        %v283 = vsel %vm263, %v252, 0
        %v286 = vsel %vm263, %v253, 0
        %288 = vmatprep.subr.mxu0 0.0
        %289 = vmatpush1.msra.mxu0 %v254
        %290 = vmatprep.subr.mxu0 0.0
        %291 = vmatpush1.msra.mxu0 %v255
        %292 = vmatprep.subr.mxu0 0.0
        %293 = vmatpush1.msra.mxu0 0.0
        %294 = vmatprep.subr.mxu0 0.0
        %295 = vmatpush1.msra.mxu0 0.0
        %296 = vmatprep.subr.mxu0 0.0
        %297 = vmatpush1.msra.mxu0 0.0
        %298 = vmatprep.subr.mxu0 0.0
        %299 = vmatpush1.msra.mxu0 0.0
        %300 = vmatprep.subr.mxu0 0.0
        %301 = vmatpush1.msra.mxu0 0.0
        %302 = vmatprep.subr.mxu0 0.0
        %303 = vmatpush1.msra.mxu0 0.0
        %304 = vmatprep.subr.mxu0 0.0
        %305 = vmatpush1.msra.mxu0 0.0
        %306 = vmatprep.subr.mxu0 0.0
        %307 = vmatpush1.msra.mxu0 0.0
        %308 = vmatprep.subr.mxu0 0.0
        %309 = vmatpush1.msra.mxu0 0.0
        %310 = vmatprep.subr.mxu0 0.0
        %311 = vmatpush1.msra.mxu0 0.0
        %312 = vmatprep.subr.mxu0 0.0
        %313 = vmatpush1.msra.mxu0 0.0
        %314 = vmatprep.subr.mxu0 0.0
        %315 = vmatpush1.msra.mxu0 0.0
        %316 = vmatprep.subr.mxu0 0.0
        %317 = vmatpush1.msra.mxu0 0.0
        %318 = vmatprep.subr.mxu0 0.0
        %319 = vmatpush1.msra.mxu0 0.0
        %320 = vmatprep.subr.mxu0 0.0
        %321 = vmatpush1.msra.mxu0 0.0
        %322 = vmatprep.subr.mxu0 0.0
        %323 = vmatpush1.msra.mxu0 0.0
        %324 = vmatprep.subr.mxu0 0.0
        %325 = vmatpush1.msra.mxu0 0.0
        %326 = vmatprep.subr.mxu0 0.0
        %327 = vmatpush1.msra.mxu0 0.0
        %328 = vmatprep.subr.mxu0 0.0
        %329 = vmatpush1.msra.mxu0 0.0
        %330 = vmatprep.subr.mxu0 0.0
        %331 = vmatpush1.msra.mxu0 0.0
        %332 = vmatprep.subr.mxu0 0.0
        %333 = vmatpush1.msra.mxu0 0.0
        %334 = vmatprep.subr.mxu0 0.0
        %335 = vmatpush1.msra.mxu0 0.0
        %336 = vmatprep.subr.mxu0 0.0
        %337 = vmatpush1.msra.mxu0 0.0
        %338 = vmatprep.subr.mxu0 0.0
        %339 = vmatpush1.msra.mxu0 0.0
        %340 = vmatprep.subr.mxu0 0.0
        %341 = vmatpush1.msra.mxu0 0.0
        %342 = vmatprep.subr.mxu0 0.0
        %343 = vmatpush1.msra.mxu0 0.0
        %344 = vmatprep.subr.mxu0 0.0
        %345 = vmatpush1.msra.mxu0 0.0
        %346 = vmatprep.subr.mxu0 0.0
        %347 = vmatpush1.msra.mxu0 0.0
        %348 = vmatprep.subr.mxu0 0.0
        %349 = vmatpush1.msra.mxu0 0.0
        %350 = vmatprep.subr.mxu0 0.0
        %351 = vmatpush1.msra.mxu0 0.0
        %352 = vmatprep.mubr.f32.mxu0 0.0
        %353 = vmatmul.mubr.f32.gmra.mrb[0].mxu0 %v265
        %v354 = vpop.f32.mrb[0].mxu0
        %v355 = vadd.f32 %v261, %v354
        %v356 = vpop.f32.mrb[0].mxu0
        %357 = vmatprep.mubr.f32.mxu0 0.0
        %358 = vmatmul.mubr.f32.gmra.mrb[0].mxu0 %v268
        %v359 = vpop.f32.mrb[0].mxu0
        %v360 = vadd.f32 %v261, %v359
        %v361 = vpop.f32.mrb[0].mxu0
        %362 = vmatprep.mubr.f32.mxu0 0.0
        %363 = vmatmul.mubr.f32.gmra.mrb[0].mxu0 %v271
        %v364 = vpop.f32.mrb[0].mxu0
        %v365 = vadd.f32 %v261, %v364
        %v366 = vpop.f32.mrb[0].mxu0
        %367 = vmatprep.mubr.f32.mxu0 0.0
        %368 = vmatmul.mubr.f32.gmra.mrb[0].mxu0 %v274
        %v369 = vpop.f32.mrb[0].mxu0
        %v370 = vadd.f32 %v261, %v369
        %v371 = vpop.f32.mrb[0].mxu0
        %372 = vmatprep.mubr.f32.mxu0 0.0
        %373 = vmatmul.mubr.f32.gmra.mrb[0].mxu0 %v277
        %v374 = vpop.f32.mrb[0].mxu0
        %v375 = vadd.f32 %v261, %v374
        %v376 = vpop.f32.mrb[0].mxu0
        %377 = vmatprep.mubr.f32.mxu0 0.0
        %378 = vmatmul.mubr.f32.gmra.mrb[0].mxu0 %v280
        %v379 = vpop.f32.mrb[0].mxu0
        %v380 = vadd.f32 %v261, %v379
        %v381 = vpop.f32.mrb[0].mxu0
        %382 = vmatprep.mubr.f32.mxu0 0.0
        %383 = vmatmul.mubr.f32.gmra.mrb[0].mxu0 %v283
        %v384 = vpop.f32.mrb[0].mxu0
        %v385 = vadd.f32 %v261, %v384
        %v386 = vpop.f32.mrb[0].mxu0
        %387 = vmatprep.mubr.f32.mxu0 0.0
        %388 = vmatmul.mubr.f32.gmra.mrb[0].mxu0 %v286
        %v389 = vpop.f32.mrb[0].mxu0
        %v390 = vadd.f32 %v261, %v389
        %v391 = vpop.f32.mrb[0].mxu0
        %392 = vdwg.mxu0
        %v393 = vtanh.pop %v355
        %v394 = vtanh.pop %v360
        %v395 = vtanh.pop %v365
        %v396 = vtanh.pop %v370
        %v397 = vtanh.pop %v375
        %v398 = vtanh.pop %v380
        %v399 = vtanh.pop %v385
        %v400 = vtanh.pop %v390
        %v401 = vld [vmem:[%s3] sm:$0xff]
        %v402 = vld [vmem:[%s3 + $0x8] sm:$0xff]
        %v403 = vld [vmem:[%s3 + $0x10] sm:$0xff]
        %v404 = vld [vmem:[%s3 + $0x18] sm:$0xff]
        %v405 = vld [vmem:[%s3 + $0x20] sm:$0xff]
        %v406 = vld [vmem:[%s3 + $0x28] sm:$0xff]
        %v407 = vld [vmem:[%s3 + $0x30] sm:$0xff]
        %v408 = vld [vmem:[%s3 + $0x38] sm:$0xff]
        %v409 = vld [vmem:[%s3 + $0x40] sm:$0xff]
        %v410 = vld [vmem:[%s3 + $0x48] sm:$0xff]
        %v411 = vld [vmem:[%s3 + $0x50] sm:$0xff]
        %v412 = vld [vmem:[%s3 + $0x58] sm:$0xff]
        %v413 = vld [vmem:[%s3 + $0x60] sm:$0xff]
        %v414 = vld [vmem:[%s3 + $0x68] sm:$0xff]
        %v415 = vld [vmem:[%s3 + $0x70] sm:$0xff]
        %v416 = vld [vmem:[%s3 + $0x78] sm:$0xff]
        %v417 = vld [vmem:[%s4] sm:$0x1]
        %v419 = vlaneseq
        %v420 = vshrl.u32 %v419, 7
        %v421 = vsub.s32 0, %v420
        %v422 = vrot.slane %v417, %v421
        %424 = vmatprep.subr.mxu0 0.0
        %425 = vmatpush1.msra.mxu0 %v401
        %426 = vmatprep.subr.mxu0 0.0
        %427 = vmatpush1.msra.mxu0 %v402
        %428 = vmatprep.subr.mxu0 0.0
        %429 = vmatpush1.msra.mxu0 %v403
        %430 = vmatprep.subr.mxu0 0.0
        %431 = vmatpush1.msra.mxu0 %v404
        %432 = vmatprep.subr.mxu0 0.0
        %433 = vmatpush1.msra.mxu0 %v405
        %434 = vmatprep.subr.mxu0 0.0
        %435 = vmatpush1.msra.mxu0 %v406
        %436 = vmatprep.subr.mxu0 0.0
        %437 = vmatpush1.msra.mxu0 %v407
        %438 = vmatprep.subr.mxu0 0.0
        %439 = vmatpush1.msra.mxu0 %v408
        %440 = vmatprep.subr.mxu0 0.0
        %441 = vmatpush1.msra.mxu0 %v409
        %442 = vmatprep.subr.mxu0 0.0
        %443 = vmatpush1.msra.mxu0 %v410
        %444 = vmatprep.subr.mxu0 0.0
        %445 = vmatpush1.msra.mxu0 %v411
        %446 = vmatprep.subr.mxu0 0.0
        %447 = vmatpush1.msra.mxu0 %v412
        %448 = vmatprep.subr.mxu0 0.0
        %449 = vmatpush1.msra.mxu0 %v413
        %450 = vmatprep.subr.mxu0 0.0
        %451 = vmatpush1.msra.mxu0 %v414
        %452 = vmatprep.subr.mxu0 0.0
        %453 = vmatpush1.msra.mxu0 %v415
        %454 = vmatprep.subr.mxu0 0.0
        %455 = vmatpush1.msra.mxu0 %v416
        %456 = vmatprep.subr.mxu0 0.0
        %457 = vmatpush1.msra.mxu0 0.0
        %458 = vmatprep.subr.mxu0 0.0
        %459 = vmatpush1.msra.mxu0 0.0
        %460 = vmatprep.subr.mxu0 0.0
        %461 = vmatpush1.msra.mxu0 0.0
        %462 = vmatprep.subr.mxu0 0.0
        %463 = vmatpush1.msra.mxu0 0.0
        %464 = vmatprep.subr.mxu0 0.0
        %465 = vmatpush1.msra.mxu0 0.0
        %466 = vmatprep.subr.mxu0 0.0
        %467 = vmatpush1.msra.mxu0 0.0
        %468 = vmatprep.subr.mxu0 0.0
        %469 = vmatpush1.msra.mxu0 0.0
        %470 = vmatprep.subr.mxu0 0.0
        %471 = vmatpush1.msra.mxu0 0.0
        %472 = vmatprep.subr.mxu0 0.0
        %473 = vmatpush1.msra.mxu0 0.0
        %474 = vmatprep.subr.mxu0 0.0
        %475 = vmatpush1.msra.mxu0 0.0
        %476 = vmatprep.subr.mxu0 0.0
        %477 = vmatpush1.msra.mxu0 0.0
        %478 = vmatprep.subr.mxu0 0.0
        %479 = vmatpush1.msra.mxu0 0.0
        %480 = vmatprep.subr.mxu0 0.0
        %481 = vmatpush1.msra.mxu0 0.0
        %482 = vmatprep.subr.mxu0 0.0
        %483 = vmatpush1.msra.mxu0 0.0
        %484 = vmatprep.subr.mxu0 0.0
        %485 = vmatpush1.msra.mxu0 0.0
        %486 = vmatprep.subr.mxu0 0.0
        %487 = vmatpush1.msra.mxu0 0.0
        %488 = vmatprep.mubr.f32.mxu0 0.0
        %489 = vmatmul.mubr.f32.gmra.mrb[0].mxu0 %v393
        %v490 = vpop.f32.mrb[0].mxu0
        %v491 = vadd.f32 %v422, %v490
        %v492 = vpop.f32.mrb[0].mxu0
        %493 = vmatprep.mubr.f32.mxu0 0.0
        %494 = vmatmul.mubr.f32.gmra.mrb[0].mxu0 %v394
        %v495 = vpop.f32.mrb[0].mxu0
        %v496 = vadd.f32 %v422, %v495
        %v497 = vpop.f32.mrb[0].mxu0
        %498 = vmatprep.mubr.f32.mxu0 0.0
        %499 = vmatmul.mubr.f32.gmra.mrb[0].mxu0 %v395
        %v500 = vpop.f32.mrb[0].mxu0
        %v501 = vadd.f32 %v422, %v500
        %v502 = vpop.f32.mrb[0].mxu0
        %503 = vmatprep.mubr.f32.mxu0 0.0
        %504 = vmatmul.mubr.f32.gmra.mrb[0].mxu0 %v396
        %v505 = vpop.f32.mrb[0].mxu0
        %v506 = vadd.f32 %v422, %v505
        %v507 = vpop.f32.mrb[0].mxu0
        %508 = vmatprep.mubr.f32.mxu0 0.0
        %509 = vmatmul.mubr.f32.gmra.mrb[0].mxu0 %v397
        %v510 = vpop.f32.mrb[0].mxu0
        %v511 = vadd.f32 %v422, %v510
        %v512 = vpop.f32.mrb[0].mxu0
        %513 = vmatprep.mubr.f32.mxu0 0.0
        %514 = vmatmul.mubr.f32.gmra.mrb[0].mxu0 %v398
        %v515 = vpop.f32.mrb[0].mxu0
        %v516 = vadd.f32 %v422, %v515
        %v517 = vpop.f32.mrb[0].mxu0
        %518 = vmatprep.mubr.f32.mxu0 0.0
        %519 = vmatmul.mubr.f32.gmra.mrb[0].mxu0 %v399
        %v520 = vpop.f32.mrb[0].mxu0
        %v521 = vadd.f32 %v422, %v520
        %v522 = vpop.f32.mrb[0].mxu0
        %523 = vmatprep.mubr.f32.mxu0 0.0
        %524 = vmatmul.mubr.f32.gmra.mrb[0].mxu0 %v400
        %v525 = vpop.f32.mrb[0].mxu0
        %v526 = vadd.f32 %v422, %v525
        %v527 = vpop.f32.mrb[0].mxu0
        %528 = vdwg.mxu0
        %vm529 = vcmask 7168
        %530 = vst.msk [vmem:[%s226] sm:$0xff] %vm529, %v491
        %531 = vst.msk [vmem:[%s226 + $0x8] sm:$0xff] %vm529, %v496
        %532 = vst.msk [vmem:[%s226 + $0x10] sm:$0xff] %vm529, %v501
        %533 = vst.msk [vmem:[%s226 + $0x18] sm:$0xff] %vm529, %v506
        %534 = vst.msk [vmem:[%s226 + $0x20] sm:$0xff] %vm529, %v511
        %535 = vst.msk [vmem:[%s226 + $0x28] sm:$0xff] %vm529, %v516
        %536 = vst.msk [vmem:[%s226 + $0x30] sm:$0xff] %vm529, %v521
        %537 = vst.msk [vmem:[%s226 + $0x38] sm:$0xff] %vm529, %v526
        %s538 = sand.u32 %s134, 1
        %s539 = sand.u32 %s134, 1
        %s540 = smul.addr %s539, 64
        %s541 = scalar_lea.vmem [#allocation2], %s540
        // Predicated region
        $region41: #{tpu_custom_call.1} parent=39 // pred_check
          %p542 = pneg %p144
        $region42: #{tpu_custom_call.1} parent=39 // pred_check_branch
          %544 = sbr.rel (%p542) target = $region44
        $region43: #{tpu_custom_call.1} parent=39 // pred_region
          %s545 = smul.u32 8, %s16
          %s546 = ssub.s32 26, %s545
          %p547 = scmp.lt.s32.totalorder %s546, 8
          %s548 = scalar_select %p547, %s546, 8
          %s549 = smul.u32 128, %s548
          %p550 = scmp.ne.s32.totalorder 0, %s549
          %s551 = smul.addr %s545, 8
          %s552 = scalar_lea.vmem %s5, %s551
          // Predicated region
          $region45: #{tpu_custom_call.1} parent=43 // pred_check
            %p553 = pneg %p550
          $region46: #{tpu_custom_call.1} parent=43 // pred_check_branch
            %555 = sbr.rel (%p553) target = $region48
          $region47: #{tpu_custom_call.1} parent=43 // pred_region
            // Predicated region
            $region49: #{tpu_custom_call.1} parent=47 // pred_check
              _
            $region50: #{tpu_custom_call.1} parent=47 // pred_check_branch
              %557 = sbr.rel (0) target = $region52
            $region51: #{tpu_custom_call.1} parent=47 // pred_region
              // Predicated region
              $region71: #{tpu_custom_call.1} parent=51 // pred_check
                _
              $region72: #{tpu_custom_call.1} parent=51 // pred_check_branch
                %620 = sbr.rel (0) target = $region74
              $region73: #{tpu_custom_call.1} parent=51 // pred_region
                %s621 = sshrl.u32 %s548, 3
                // While loop
                $region75: #{tpu_custom_call.1} parent=73 // loop_pre_header
                  _
                $region76: #{tpu_custom_call.1} parent=73 // loop_header
                  %s623 = sphi 0, %s625
                  %p624 = scmp.ge.s32.totalorder %s623, %s621
                  %s628 = sphi 0, %s649
                  %s629 = sphi %s541, %s652
                  %s630 = sphi %s552, %s653
                $region77: #{tpu_custom_call.1} parent=73 // loop_header_branch
                  %627 = sbr.rel (%p624) target = $region81
                $region78: #{tpu_custom_call.1} parent=73 // loop_body
                  %v631 = vld [vmem:[%s629] sm:$0xff]
                  %632 = vst [vmem:[%s630] sm:$0xff] %v631
                  %v633 = vld [vmem:[%s629 + $0x8] sm:$0xff]
                  %634 = vst [vmem:[%s630 + $0x8] sm:$0xff] %v633
                  %v635 = vld [vmem:[%s629 + $0x10] sm:$0xff]
                  %636 = vst [vmem:[%s630 + $0x10] sm:$0xff] %v635
                  %v637 = vld [vmem:[%s629 + $0x18] sm:$0xff]
                  %638 = vst [vmem:[%s630 + $0x18] sm:$0xff] %v637
                  %v639 = vld [vmem:[%s629 + $0x20] sm:$0xff]
                  %640 = vst [vmem:[%s630 + $0x20] sm:$0xff] %v639
                  %v641 = vld [vmem:[%s629 + $0x28] sm:$0xff]
                  %642 = vst [vmem:[%s630 + $0x28] sm:$0xff] %v641
                  %v643 = vld [vmem:[%s629 + $0x30] sm:$0xff]
                  %644 = vst [vmem:[%s630 + $0x30] sm:$0xff] %v643
                  %v645 = vld [vmem:[%s629 + $0x38] sm:$0xff]
                  %646 = vst [vmem:[%s630 + $0x38] sm:$0xff] %v645
                  %s647 = sadd.s32 1, %s628
                  %p648 = scmp.ge.s32.totalorder %s647, %s621
                  %s649 = scalar_select %p648, 0, %s647
                  %s650 = smul.u32 %s649, 64
                  %s651 = smul.u32 %s649, 64
                  %s652 = scalar_lea.vmem %s541, %s650 [#allocation2]
                  %s653 = scalar_lea.vmem %s552, %s651
                $region79: #{tpu_custom_call.1} parent=73 // loop_footer
                  %s625 = sadd.s32 %s623, 1
                $region80: #{tpu_custom_call.1} parent=73 // loop_footer_branch
                  %622 = sbr.rel target = $region76
                $region81: #{tpu_custom_call.1} parent=73 // loop_exit
                  _
                %s654 = sshrl.u32 %s548, 3
                %s655 = sand.u32 %s548, 7
                %s656 = smul.u32 %s654, 8
                %s657 = smul.u32 8, %s656
                %s658 = scalar_lea.vmem %s541, %s657 [#allocation2]
                %s659 = smul.u32 8, %s656
                %s660 = scalar_lea.vmem %s552, %s659
                // While loop
                $region82: #{tpu_custom_call.1} parent=73 // loop_pre_header
                  _
                $region83: #{tpu_custom_call.1} parent=73 // loop_header
                  %s662 = sphi 0, %s664
                  %p663 = scmp.ge.s32.totalorder %s662, %s655
                  %s667 = sphi 0, %s674
                  %s668 = sphi %s658, %s677
                  %s669 = sphi %s660, %s678
                $region84: #{tpu_custom_call.1} parent=73 // loop_header_branch
                  %666 = sbr.rel (%p663) target = $region88
                $region85: #{tpu_custom_call.1} parent=73 // loop_body
                  %v670 = vld [vmem:[%s668] sm:$0xff]
                  %671 = vst [vmem:[%s669] sm:$0xff] %v670
                  %s672 = sadd.s32 1, %s667
                  %p673 = scmp.ge.s32.totalorder %s672, %s655
                  %s674 = scalar_select %p673, 0, %s672
                  %s675 = smul.u32 %s674, 8
                  %s676 = smul.u32 %s674, 8
                  %s677 = scalar_lea.vmem %s658, %s675 [#allocation2]
                  %s678 = scalar_lea.vmem %s660, %s676
                $region86: #{tpu_custom_call.1} parent=73 // loop_footer
                  %s664 = sadd.s32 %s662, 1
                $region87: #{tpu_custom_call.1} parent=73 // loop_footer_branch
                  %661 = sbr.rel target = $region83
                $region88: #{tpu_custom_call.1} parent=73 // loop_exit
                  _
              $region74: #{tpu_custom_call.1} parent=51 // pred_fallthru
                _
              // Predicated region
              $region89: #{tpu_custom_call.1} parent=51 // pred_check
                _
              $region90: #{tpu_custom_call.1} parent=51 // pred_check_branch
                %680 = sbr.rel target = $region92
              $region91: #{tpu_custom_call.1} parent=51 // pred_region
                _
              $region92: #{tpu_custom_call.1} parent=51 // pred_fallthru
                _
            $region52: #{tpu_custom_call.1} parent=47 // pred_fallthru
              _
            // Predicated region
            $region53: #{tpu_custom_call.1} parent=47 // pred_check
              _
            $region54: #{tpu_custom_call.1} parent=47 // pred_check_branch
              %559 = sbr.rel target = $region56
            $region55: #{tpu_custom_call.1} parent=47 // pred_region
              %s561 = sshrl.u32 %s548, 3
              // While loop
              $region57: #{tpu_custom_call.1} parent=55 // loop_pre_header
                _
              $region58: #{tpu_custom_call.1} parent=55 // loop_header
                %s563 = sphi 0, %s565
                %p564 = scmp.ge.s32.totalorder %s563, %s561
                %s568 = sphi 0, %s589
                %s569 = sphi %s541, %s592
                %s570 = sphi %s552, %s593
              $region59: #{tpu_custom_call.1} parent=55 // loop_header_branch
                %567 = sbr.rel (%p564) target = $region63
              $region60: #{tpu_custom_call.1} parent=55 // loop_body
                %v571 = vld [vmem:[%s569] sm:$0xff]
                %572 = vst [vmem:[%s570] sm:$0xff] %v571
                %v573 = vld [vmem:[%s569 + $0x8] sm:$0xff]
                %574 = vst [vmem:[%s570 + $0x8] sm:$0xff] %v573
                %v575 = vld [vmem:[%s569 + $0x10] sm:$0xff]
                %576 = vst [vmem:[%s570 + $0x10] sm:$0xff] %v575
                %v577 = vld [vmem:[%s569 + $0x18] sm:$0xff]
                %578 = vst [vmem:[%s570 + $0x18] sm:$0xff] %v577
                %v579 = vld [vmem:[%s569 + $0x20] sm:$0xff]
                %580 = vst [vmem:[%s570 + $0x20] sm:$0xff] %v579
                %v581 = vld [vmem:[%s569 + $0x28] sm:$0xff]
                %582 = vst [vmem:[%s570 + $0x28] sm:$0xff] %v581
                %v583 = vld [vmem:[%s569 + $0x30] sm:$0xff]
                %584 = vst [vmem:[%s570 + $0x30] sm:$0xff] %v583
                %v585 = vld [vmem:[%s569 + $0x38] sm:$0xff]
                %586 = vst [vmem:[%s570 + $0x38] sm:$0xff] %v585
                %s587 = sadd.s32 1, %s568
                %p588 = scmp.ge.s32.totalorder %s587, %s561
                %s589 = scalar_select %p588, 0, %s587
                %s590 = smul.u32 %s589, 64
                %s591 = smul.u32 %s589, 64
                %s592 = scalar_lea.vmem %s541, %s590 [#allocation2]
                %s593 = scalar_lea.vmem %s552, %s591
              $region61: #{tpu_custom_call.1} parent=55 // loop_footer
                %s565 = sadd.s32 %s563, 1
              $region62: #{tpu_custom_call.1} parent=55 // loop_footer_branch
                %562 = sbr.rel target = $region58
              $region63: #{tpu_custom_call.1} parent=55 // loop_exit
                _
              %s594 = sshrl.u32 %s548, 3
              %s595 = sand.u32 %s548, 7
              %s596 = smul.u32 %s594, 8
              %s597 = smul.u32 8, %s596
              %s598 = scalar_lea.vmem %s541, %s597 [#allocation2]
              %s599 = smul.u32 8, %s596
              %s600 = scalar_lea.vmem %s552, %s599
              // While loop
              $region64: #{tpu_custom_call.1} parent=55 // loop_pre_header
                _
              $region65: #{tpu_custom_call.1} parent=55 // loop_header
                %s602 = sphi 0, %s604
                %p603 = scmp.ge.s32.totalorder %s602, %s595
                %s607 = sphi 0, %s614
                %s608 = sphi %s598, %s617
                %s609 = sphi %s600, %s618
              $region66: #{tpu_custom_call.1} parent=55 // loop_header_branch
                %606 = sbr.rel (%p603) target = $region70
              $region67: #{tpu_custom_call.1} parent=55 // loop_body
                %v610 = vld [vmem:[%s608] sm:$0xff]
                %611 = vst [vmem:[%s609] sm:$0xff] %v610
                %s612 = sadd.s32 1, %s607
                %p613 = scmp.ge.s32.totalorder %s612, %s595
                %s614 = scalar_select %p613, 0, %s612
                %s615 = smul.u32 %s614, 8
                %s616 = smul.u32 %s614, 8
                %s617 = scalar_lea.vmem %s598, %s615 [#allocation2]
                %s618 = scalar_lea.vmem %s600, %s616
              $region68: #{tpu_custom_call.1} parent=55 // loop_footer
                %s604 = sadd.s32 %s602, 1
              $region69: #{tpu_custom_call.1} parent=55 // loop_footer_branch
                %601 = sbr.rel target = $region65
              $region70: #{tpu_custom_call.1} parent=55 // loop_exit
                _
            $region56: #{tpu_custom_call.1} parent=47 // pred_fallthru
              _
          $region48: #{tpu_custom_call.1} parent=43 // pred_fallthru
            _
          %681 = vnop
        $region44: #{tpu_custom_call.1} parent=39 // pred_fallthru
          _
      $region40: #{tpu_custom_call.1} parent=5 // pred_fallthru
        _
      %p682 = scmp.le.s32.totalorder 2, %s11
      // Predicated region
      $region93: #{tpu_custom_call.1} parent=5 // pred_check
        %p683 = pneg %p682
      $region94: #{tpu_custom_call.1} parent=5 // pred_check_branch
        %685 = sbr.rel (%p683) target = $region96
      $region95: #{tpu_custom_call.1} parent=5 // pred_region
        %s686 = ssub.s32 %s11, 2
        // Predicated region
        $region97: #{tpu_custom_call.1} parent=95 // pred_check
          %p687 = pneg %p150
        $region98: #{tpu_custom_call.1} parent=95 // pred_check_branch
          %689 = sbr.rel (%p687) target = $region100
        $region99: #{tpu_custom_call.1} parent=95 // pred_region
          %s690 = sand.u32 %s135, 1
          %s691 = sand.u32 %s135, 1
          %s692 = smul.addr %s691, 64
          %s693 = scalar_lea.vmem [#allocation2], %s692
        $region100: #{tpu_custom_call.1} parent=95 // pred_fallthru
          _
      $region96: #{tpu_custom_call.1} parent=5 // pred_fallthru
        _
    $region6: #{tpu_custom_call.1} parent=1 // loop_footer
      %s15 = sadd.s32 1, %s11
    $region7: #{tpu_custom_call.1} parent=1 // loop_footer_branch
      %10 = sbr.rel target = $region3
    $region8: #{tpu_custom_call.1} parent=1 // loop_exit
      _

</llo_original>
